<compile_context>
chip_gen: v7x
topology: tpu7x:2x2x1
jax: 0.10.0
libtpu: 0.0.40
codegen_flags: <defaults>
</compile_context>

<pallas_src>
import functools

import jax
import jax.numpy as jnp
from jax.experimental import pallas as pl
from jax.experimental.pallas import tpu as pltpu


# ----------------------------- kernel body -----------------------------------

def _rmsnorm_kernel(x_ref, w_ref, o_ref, *, eps):
    # x_ref: (tile_rows, d) block in VMEM, io dtype
    # w_ref: (1, d) f32 weight, constant index_map -> fetched once
    x = x_ref[...].astype(jnp.float32)
    ms = jnp.mean(x * x, axis=-1, keepdims=True)          # (tile_rows, 1)
    inv = jax.lax.rsqrt(ms + eps)                          # EUP rsqrt
    o_ref[...] = (x * inv * w_ref[...]).astype(o_ref.dtype)


# --------------------------- tiling / VMEM sizing -----------------------------

def _round_up(x, m):
    return ((x + m - 1) // m) * m


def _vmem_limit_bytes():
    """Scoped VMEM limit to request, per chip generation."""
    mib = 1024 * 1024
    try:
        info = pltpu.get_tpu_info()
        phys = int(getattr(info, "vmem_capacity_bytes", 64 * mib))
    except Exception:
        phys = 64 * mib  # conservative fallback (v7x per-TC physical)
    if phys >= 128 * mib:
        # v5e / v6e: use most of the 128 MiB, keep headroom for Mosaic scratch.
        limit = 100 * mib
    else:
        # v7x (64 MiB per TC) or unknown: leave ~16 MiB headroom.
        limit = max(32 * mib, phys - 16 * mib)
    return int(limit)


def _pick_tile_rows(n_rows, d, io_bytes, vmem_limit):
    """Row tile sized for (a) VMEM fit, (b) multi-MiB HBM traffic per grid
    step, (c) >= ~8 grid steps when rows allow (pipelining / dual-TC)."""
    # (a) VMEM cap: 2x double-buffered input + 2x output in io dtype, plus
    #     ~8 B/elem of f32 temporaries (upcast x + y before downcast).
    per_row_vmem = d * (4 * io_bytes + 8)
    vmem_rows = max(8, int(vmem_limit * 0.6) // per_row_vmem)

    # (b) bytes-per-step target: ~4 MiB of (in + out) HBM traffic per step.
    target_step_bytes = 4 * 1024 * 1024
    step_rows = max(8, target_step_bytes // (2 * d * io_bytes))

    tr = min(vmem_rows, step_rows, 8192)
    tr = max(8, (tr // 8) * 8)

    # Never exceed the (sublane-rounded) total row count.
    tr = min(tr, _round_up(max(n_rows, 8), 8))

    # (c) keep >= MIN_STEPS grid steps when there are enough rows, so each
    #     TensorCore (2 on v7x) gets >= ~4 pipelined steps.
    MIN_STEPS = 8
    if n_rows >= MIN_STEPS * 8:
        tr = min(tr, max(8, (n_rows // MIN_STEPS) // 8 * 8))
    return tr


# ---------------------- cached pallas_call construction -----------------------

@functools.lru_cache(maxsize=None)
def _build_rmsnorm_call(n_rows, d, dtype_name, eps, tile_rows, vmem_limit):
    dtype = jnp.dtype(dtype_name)
    kernel = functools.partial(_rmsnorm_kernel, eps=eps)
    grid = (pl.cdiv(n_rows, tile_rows),)
    return pl.pallas_call(
        kernel,
        out_shape=jax.ShapeDtypeStruct((n_rows, d), dtype),
        grid_spec=pltpu.PrefetchScalarGridSpec(
            num_scalar_prefetch=0,
            grid=grid,
            in_specs=[
                # Last dim == full array d (satisfies the (8,128)-or-full-dim
                # rule even when d % 128 != 0); rows tiled, final block masked.
                pl.BlockSpec((tile_rows, d), lambda i: (i, 0)),
                pl.BlockSpec((1, d), lambda i: (0, 0)),
            ],
            out_specs=pl.BlockSpec((tile_rows, d), lambda i: (i, 0)),
        ),
        compiler_params=pltpu.CompilerParams(
            dimension_semantics=("parallel",),
            vmem_limit_bytes=int(vmem_limit),
        ),
    )


# --------------------------------- wrapper ------------------------------------

def rmsnorm(x, weight, eps=1e-5, *, tile_rows=None):
    """RMSNorm over the last axis of x. x: (..., d_model), weight: (d_model,)."""
    orig_shape = x.shape
    d = orig_shape[-1]
    x2 = x.reshape(-1, d)                      # (N, D), native dtype
    n_rows = x2.shape[0]
    io_bytes = jnp.dtype(x.dtype).itemsize

    vmem_limit = _vmem_limit_bytes()
    tr = tile_rows if tile_rows is not None else _pick_tile_rows(
        n_rows, d, io_bytes, vmem_limit)
    tr = max(8, (int(tr) // 8) * 8)

    # Pre-cast weight to f32 once in the wrapper (tiny; fetched once in-kernel).
    w2 = weight.astype(jnp.float32).reshape(1, d)

    call = _build_rmsnorm_call(
        int(n_rows), int(d), jnp.dtype(x.dtype).name,
        float(eps), int(tr), int(vmem_limit))

    out = call(x2, w2)
    return out.reshape(orig_shape)


# -------------------------------- reference -----------------------------------

def rmsnorm_ref(x, weight, eps=1e-5):
    xf = x.astype(jnp.float32)
    ms = jnp.mean(xf * xf, axis=-1, keepdims=True)
    return (xf * jax.lax.rsqrt(ms + eps) * weight.astype(jnp.float32)).astype(x.dtype)


if __name__ == "__main__":
    key = jax.random.PRNGKey(0)

    # Primary check: shapes implied by the module (batch=2, seq=8, d_model=32),
    # weight = ones to match nn.Parameter(torch.ones(d_model)).
    batch, seq, d_model = 2, 8, 32
    x = jax.random.normal(key, (batch, seq, d_model), dtype=jnp.float32)
    weight = jnp.ones((d_model,), dtype=jnp.float32)

    y = rmsnorm(x, weight, eps=1e-5)
    y = jax.block_until_ready(y)
    y_ref = rmsnorm_ref(x, weight, eps=1e-5)
    assert y.shape == x.shape
    assert jnp.allclose(y, y_ref, atol=1e-5, rtol=1e-5), "mismatch vs reference (primary)"

    # Secondary check: exercises the masked partial final row-block and a
    # d_model that is not a multiple of 128 (masked lane-group store).
    k1, k2 = jax.random.split(key)
    x2 = jax.random.normal(k1, (5, 13, 160), dtype=jnp.float32)
    w2 = jax.random.normal(k2, (160,), dtype=jnp.float32)
    y2 = jax.block_until_ready(rmsnorm(x2, w2, eps=1e-5))
    y2_ref = rmsnorm_ref(x2, w2, eps=1e-5)
    assert y2.shape == x2.shape
    assert jnp.allclose(y2, y2_ref, atol=1e-5, rtol=1e-5), "mismatch vs reference (secondary)"

    print("KERNEL_OK")
</pallas_src>

<mosaic_0001>
module attributes {stable_mosaic.version = 11 : i64} {
  func.func @_rmsnorm_kernel(%arg0: i32, %arg1: memref<16x32xf32, #tpu.memory_space<vmem>>, %arg2: memref<1x32xf32, #tpu.memory_space<vmem>>, %arg3: memref<16x32xf32, #tpu.memory_space<vmem>>) attributes {dimension_semantics = [#tpu.dimension_semantics<parallel>], iteration_bounds = array<i64: 1>, scalar_prefetch = 0 : i64, scratch_operands = 0 : i64, tpu.core_type = #tpu.core_type<tc>, window_params = [{transform_indices = @transform_0, window_bounds = array<i64: 16, 32>}, {pipeline_mode = #tpu.pipeline_mode<synchronous>, transform_indices = @transform_1, window_bounds = array<i64: 1, 32>}, {transform_indices = @transform_2, window_bounds = array<i64: 16, 32>}]} {
    %c0 = arith.constant 0 : index
    %c0_0 = arith.constant 0 : index
    %0 = vector.load %arg1[%c0, %c0_0] : memref<16x32xf32, #tpu.memory_space<vmem>>, vector<16x32xf32>
    %1 = arith.mulf %0, %0 : vector<16x32xf32>
    %cst = arith.constant dense<0.000000e+00> : vector<16xf32>
    %2 = vector.multi_reduction <add>, %1, %cst [1] : vector<16x32xf32> to vector<16xf32>
    %3 = vector.shape_cast %2 : vector<16xf32> to vector<16x1xf32>
    %cst_1 = arith.constant 3.200000e+01 : f32
    %4 = vector.broadcast %cst_1 : f32 to vector<16x1xf32>
    %5 = arith.divf %3, %4 : vector<16x1xf32>
    %cst_2 = arith.constant 9.99999974E-6 : f32
    %6 = vector.broadcast %cst_2 : f32 to vector<16x1xf32>
    %7 = arith.addf %5, %6 : vector<16x1xf32>
    %8 = math.rsqrt %7 : vector<16x1xf32>
    %9 = vector.broadcast %8 : vector<16x1xf32> to vector<16x32xf32>
    %10 = arith.mulf %0, %9 : vector<16x32xf32>
    %c0_3 = arith.constant 0 : index
    %c0_4 = arith.constant 0 : index
    %11 = vector.load %arg2[%c0_3, %c0_4] : memref<1x32xf32, #tpu.memory_space<vmem>>, vector<1x32xf32>
    %12 = vector.broadcast %11 : vector<1x32xf32> to vector<16x32xf32>
    %13 = arith.mulf %10, %12 : vector<16x32xf32>
    %c0_5 = arith.constant 0 : index
    %c0_6 = arith.constant 0 : index
    %14 = vector.load %arg3[%c0_5, %c0_6] : memref<16x32xf32, #tpu.memory_space<vmem>>, vector<16x32xf32>
    tpu.vector_store %arg3[%c0_5, %c0_6], %13 {strides = array<i32>} : memref<16x32xf32, #tpu.memory_space<vmem>>, vector<16x32xf32>,
    return
  }
  func.func @transform_0(%arg0: i32) -> (i32, i32) {
    %c0_i32 = arith.constant 0 : i32
    %c0_i32_0 = arith.constant 0 : i32
    return %arg0, %c0_i32 : i32, i32
  }
  func.func @transform_1(%arg0: i32) -> (i32, i32) {
    %c0_i32 = arith.constant 0 : i32
    %c0_i32_0 = arith.constant 0 : i32
    %c0_i32_1 = arith.constant 0 : i32
    return %c0_i32, %c0_i32_0 : i32, i32
  }
  func.func @transform_2(%arg0: i32) -> (i32, i32) {
    %c0_i32 = arith.constant 0 : i32
    %c0_i32_0 = arith.constant 0 : i32
    return %arg0, %c0_i32 : i32, i32
  }
}

</mosaic_0001>

<llo_original>
// kernel: tpu_custom_call.1
$region0: #{tpu_custom_call.1}
  #allocation0 [shape = 'u32[]', space=smem, size = 0x4, offset = 0x4, fixed_abs, tag = 'smem constant byte address 0x4 - core index']
  #allocation1 [shape = 'u32[144,128]{1,0:T(1,128)}', space=vmem, size = 0x12000, scoped, tag = 'internal scratch']
  %s0 = inlined_call_operand.hbm [shape: f32[16,32], index: 0, kind: input, shape index: {}]
  %s1 = inlined_call_operand.vmem [shape: f32[1,32], index: 1, kind: input, shape index: {}]
  %s2 = inlined_call_operand.hbm [shape: f32[16,32], index: 2, kind: output, shape index: {}]
  %s3 = sld [smem:[#allocation0]]
  $region22: #{tpu_custom_call.1} parent=0
    _
  %s5 = ssub.s32 1, %s3
  %s6 = scalar_select 0, %s5, %s3
  $region1: #{tpu_custom_call.1} parent=0
    #allocation2 [shape = 'u8[8192]{0}', space=vmem, size = 0x2000, scoped, tag = 'input window, operand 0, single buffered']
    #allocation3 [shape = 's32[1]{0}', space=sflag, size = 0x4, scoped, tag = 'scoped memory for tpu_custom_call.1']
    #allocation4 [shape = 's32[1]{0}', space=sflag, size = 0x4, scoped, tag = 'scoped memory for tpu_custom_call.1']
    #allocation5 [shape = 'u8[8192]{0}', space=vmem, size = 0x2000, scoped, tag = 'output window, operand 0, single buffered']
    %7 = vsyncpa [#allocation3], 0
    %8 = vsyncpa [#allocation4], 0
    // Predicated region
    $region2: #{tpu_custom_call.1} parent=1 // pred_check
      _
    $region3: #{tpu_custom_call.1} parent=1 // pred_check_branch
      %10 = sbr.rel (0) target = $region5
    $region4: #{tpu_custom_call.1} parent=1 // pred_region
      %s12 = ssub.s32 256, 256
      %13 = vsyncadd [#allocation3], %s12
      %s14 = sshll.u32 [#allocation2], 4
      %s15 = int_to_ptr.vmem [resolvable:$true] %s14
      %20 = dma.hbm_to_vmem [thread:$0]  %s0, 256, %s15, [#allocation3], 128, 128, 8
    $region5: #{tpu_custom_call.1} parent=1 // pred_fallthru
      _
    // Predicated region
    $region6: #{tpu_custom_call.1} parent=1 // pred_check
      _
    $region7: #{tpu_custom_call.1} parent=1 // pred_check_branch
      %22 = sbr.rel (0) target = $region9
    $region8: #{tpu_custom_call.1} parent=1 // pred_region
      _
    $region9: #{tpu_custom_call.1} parent=1 // pred_fallthru
      _
    // Predicated region
    $region10: #{tpu_custom_call.1} parent=1 // pred_check
      _
    $region11: #{tpu_custom_call.1} parent=1 // pred_check_branch
      %24 = sbr.rel (0) target = $region13
    $region12: #{tpu_custom_call.1} parent=1 // pred_region
      %25 = dma.done [#allocation3], 256
    $region13: #{tpu_custom_call.1} parent=1 // pred_fallthru
      _
    %v26 = vld [vmem:[#allocation2] sm:$0xff]
    %v27 = vld [vmem:[#allocation2 + $0x8] sm:$0xff]
    %v28 = vmul.f32 %v26, %v26
    %v29 = vmul.f32 %v27, %v27
    %vm30 = vcmask 261120
    %v31 = vsel %vm30, %v28, 0.0
    %32 = vadd.xlane.f32.xlu0 %v31
    %v33 = vpop.xlane.xlu0 %32
    %v34 = vsel %vm30, %v29, 0.0
    %35 = vadd.xlane.f32.xlu0 %v34
    %v36 = vpop.xlane.xlu0 %35
    %v37 = vrcp.pop 32.0
    %v38 = vmul.f32 %v33, %v37
    %v39 = vmul.f32 %v36, %v37
    %v40 = vadd.f32 %v38, 1e-05
    %v41 = vadd.f32 %v39, 1e-05
    %v42 = vrsqrt.pop %v40
    %v43 = vrsqrt.pop %v41
    %v44 = vmul.f32 %v26, %v42
    %v45 = vmul.f32 %v27, %v43
    %v46 = vld [vmem:[%s1] sm:$0x1]
    %v48 = vlaneseq
    %v49 = vshrl.u32 %v48, 7
    %v50 = vsub.s32 0, %v49
    %v51 = vrot.slane %v46, %v50
    %v53 = vmul.f32 %v44, %v51
    %v54 = vmul.f32 %v45, %v51
    %55 = vst.msk [vmem:[#allocation5] sm:$0xff] %vm30, %v53
    %56 = vst.msk [vmem:[#allocation5 + $0x8] sm:$0xff] %vm30, %v54
    // Predicated region
    $region14: #{tpu_custom_call.1} parent=1 // pred_check
      _
    $region15: #{tpu_custom_call.1} parent=1 // pred_check_branch
      %58 = sbr.rel (0) target = $region17
    $region16: #{tpu_custom_call.1} parent=1 // pred_region
      %s60 = ssub.s32 256, 256
      %61 = vsyncadd [#allocation4], %s60
      %s62 = sshll.u32 [#allocation5], 4
      %s63 = int_to_ptr.vmem [resolvable:$true] %s62
      %68 = dma.vmem_to_hbm [thread:$0]  %s63, 256, %s2, [#allocation4], 128, 128, 8
    $region17: #{tpu_custom_call.1} parent=1 // pred_fallthru
      _
    // Predicated region
    $region18: #{tpu_custom_call.1} parent=1 // pred_check
      _
    $region19: #{tpu_custom_call.1} parent=1 // pred_check_branch
      %70 = sbr.rel (0) target = $region21
    $region20: #{tpu_custom_call.1} parent=1 // pred_region
      %71 = dma.done [#allocation4], 256
    $region21: #{tpu_custom_call.1} parent=1 // pred_fallthru
      _
    %72 = vsyncpa [#allocation3], 1
    %73 = vsyncpa [#allocation4], 1

</llo_original>
